<compile_context>
chip_gen: v5e
topology: v5e:2x2
jax: 0.10.0
libtpu: 0.0.40
codegen_flags: <defaults>
</compile_context>

<pallas_src>
import jax
import jax.numpy as jnp
from jax.experimental import pallas as pl
from jax.experimental.pallas import tpu as pltpu


def _round_up(x, m):
    return (x + m - 1) // m * m


def bottleneck_kernel(x_ori_ref, x_paras_ref,
                      w_in_ref, b_in_ref,
                      w_out_ref, b_out_ref,
                      out_ref):
    # (tm, Dp) f32 tile of the original tokens (kept f32 for the residual).
    x_ori = x_ori_ref[...].astype(jnp.float32)

    # VPU reduction over the P paraphrase tiles -> one matmul instead of P.
    x_sum = jnp.sum(x_paras_ref[...].astype(jnp.float32), axis=0)     # (tm, Dp)

    wdt = w_in_ref.dtype
    # Fused input projection: concat along features, K = 2*Dp against the
    # stacked [W_in_ori; W_in_para] weight.  Folded bias added once.
    x_cat = jnp.concatenate([x_ori, x_sum], axis=-1).astype(wdt)      # (tm, 2*Dp)
    h = jnp.dot(x_cat, w_in_ref[...],
                preferred_element_type=jnp.float32) + b_in_ref[...]   # (tm, Dint)

    # Output projection.
    y = jnp.dot(h.astype(wdt), w_out_ref[...],
                preferred_element_type=jnp.float32) + b_out_ref[...]  # (tm, Dp)

    # ReLU + residual in f32.
    out_ref[...] = (jnp.maximum(y, 0.0) + x_ori).astype(out_ref.dtype)


def _prepare_fused_params(params, n_para, dp, dint, dp_pad, dint_pad,
                          compute_dtype):
    """Pad to 128-lane multiples, stack input weights, fold biases."""
    f32 = jnp.float32
    w_in = jnp.zeros((2 * dp_pad, dint_pad), f32)
    w_in = w_in.at[:dp, :dint].set(params["w_in_ori"].astype(f32))
    w_in = w_in.at[dp_pad:dp_pad + dp, :dint].set(params["w_in_para"].astype(f32))

    b_in = jnp.zeros((1, dint_pad), f32)
    b_in = b_in.at[:, :dint].set(
        params["b_in_ori"].astype(f32) + n_para * params["b_in_para"].astype(f32))

    w_out = jnp.zeros((dint_pad, dp_pad), f32)
    w_out = w_out.at[:dint, :dp].set(params["w_out"].astype(f32))

    b_out = jnp.zeros((1, dp_pad), f32)
    b_out = b_out.at[:, :dp].set(params["b_out"].astype(f32))

    return (w_in.astype(compute_dtype), b_in,
            w_out.astype(compute_dtype), b_out)


def bottleneck_block(x_ori, x_paras, params, *, tm=512,
                     compute_dtype=jnp.float32, vmem_limit_bytes=None):
    """x_ori: (..., D_proj); x_paras: (P, ..., D_proj) stacked paraphrases.

    tm: row-tile size (multiple of 8).  512-1024 is good on v5e/v6e; use a
        smaller tile (e.g. 256) on v7x's 64 MiB VMEM if VMEM-limited.
    compute_dtype: dtype of matmul operands (use jnp.bfloat16 on v6e/v7x to
        halve HBM traffic); accumulation / relu / residual stay f32.
    """
    lead_shape = x_ori.shape[:-1]
    d_proj = x_ori.shape[-1]
    d_int = params["w_in_ori"].shape[1]
    n_para = x_paras.shape[0]

    x_ori_2d = x_ori.reshape(-1, d_proj)
    x_paras_3d = x_paras.reshape(n_para, -1, d_proj)
    m = x_ori_2d.shape[0]

    # Lane-dense padding of feature dims; row padding up to the tile size.
    dp_pad = _round_up(d_proj, 128)
    dint_pad = _round_up(d_int, 128)
    tm_eff = min(_round_up(tm, 8), _round_up(m, 8))
    m_pad = _round_up(m, tm_eff)

    x_ori_p = jnp.pad(x_ori_2d.astype(jnp.float32),
                      ((0, m_pad - m), (0, dp_pad - d_proj)))
    x_paras_p = jnp.pad(x_paras_3d.astype(compute_dtype),
                        ((0, 0), (0, m_pad - m), (0, dp_pad - d_proj)))

    w_in, b_in, w_out, b_out = _prepare_fused_params(
        params, n_para, d_proj, d_int, dp_pad, dint_pad, compute_dtype)

    grid = (m_pad // tm_eff,)
    in_specs = [
        pl.BlockSpec((tm_eff, dp_pad), lambda i: (i, 0)),            # x_ori tile
        pl.BlockSpec((n_para, tm_eff, dp_pad), lambda i: (0, i, 0)),  # x_paras tile
        pl.BlockSpec((2 * dp_pad, dint_pad), lambda i: (0, 0)),       # W_in (stacked)
        pl.BlockSpec((1, dint_pad), lambda i: (0, 0)),                # b_in (folded)
        pl.BlockSpec((dint_pad, dp_pad), lambda i: (0, 0)),           # W_out
        pl.BlockSpec((1, dp_pad), lambda i: (0, 0)),                  # b_out
    ]
    out_specs = pl.BlockSpec((tm_eff, dp_pad), lambda i: (i, 0))

    out = pl.pallas_call(
        bottleneck_kernel,
        out_shape=jax.ShapeDtypeStruct((m_pad, dp_pad), jnp.float32),
        grid=grid,
        in_specs=in_specs,
        out_specs=out_specs,
        compiler_params=pltpu.CompilerParams(
            dimension_semantics=("parallel",),
            vmem_limit_bytes=vmem_limit_bytes),
    )(x_ori_p, x_paras_p, w_in, b_in, w_out, b_out)

    out = out[:m, :d_proj].astype(x_ori.dtype)
    return out.reshape(*lead_shape, d_proj)


def make_params(key, projection_dim, intermediate_dim):
    """Deterministic synthetic parameters (PyTorch Linear shapes, transposed)."""
    k1, k2, k3, k4, k5, k6 = jax.random.split(key, 6)
    s_in = 1.0 / jnp.sqrt(projection_dim)
    s_mid = 1.0 / jnp.sqrt(intermediate_dim)
    return {
        # weights stored as (in_dim, out_dim) == W^T of torch.nn.Linear.weight
        "w_in_ori": jax.random.uniform(k1, (projection_dim, intermediate_dim),
                                       jnp.float32, -s_in, s_in),
        "b_in_ori": jax.random.uniform(k2, (1, intermediate_dim),
                                       jnp.float32, -s_in, s_in),
        "w_in_para": jax.random.uniform(k3, (projection_dim, intermediate_dim),
                                        jnp.float32, -s_in, s_in),
        "b_in_para": jax.random.uniform(k4, (1, intermediate_dim),
                                        jnp.float32, -s_in, s_in),
        "w_out": jax.random.uniform(k5, (intermediate_dim, projection_dim),
                                    jnp.float32, -s_mid, s_mid),
        "b_out": jax.random.uniform(k6, (1, projection_dim),
                                    jnp.float32, -s_mid, s_mid),
    }


def reference_forward(x_ori, x_paras, params):
    """Pure-JAX reference mirroring the PyTorch forward."""
    x = x_ori @ params["w_in_ori"] + params["b_in_ori"][0]
    for p in range(x_paras.shape[0]):
        x = x + x_paras[p] @ params["w_in_para"] + params["b_in_para"][0]
    x = x @ params["w_out"] + params["b_out"][0]
    return jnp.maximum(x, 0.0) + x_ori


if __name__ == "__main__":
    key = jax.random.PRNGKey(0)
    k_params, k_ori, k_para = jax.random.split(key, 3)

    batch, seq = 2, 8
    projection_dim, intermediate_dim = 32, 64
    n_paras = 3

    params = make_params(k_params, projection_dim, intermediate_dim)
    x_ori = jax.random.normal(k_ori, (batch, seq, projection_dim), jnp.float32)
    x_paras = jax.random.normal(
        k_para, (n_paras, batch, seq, projection_dim), jnp.float32)

    out = bottleneck_block(x_ori, x_paras, params)
    out = jax.block_until_ready(out)

    ref = reference_forward(x_ori, x_paras, params)
    assert out.shape == x_ori.shape
    # bias folding / paraphrase-sum reassociation => tiny f32 rounding diffs
    assert jnp.allclose(out, ref, atol=1e-4, rtol=1e-4), "mismatch vs reference"

    print("KERNEL_OK")
</pallas_src>

<mosaic_0001>
module attributes {stable_mosaic.version = 11 : i64} {
  func.func @bottleneck_kernel(%arg0: i32, %arg1: memref<16x128xf32, #tpu.memory_space<vmem>>, %arg2: memref<3x16x128xf32, #tpu.memory_space<vmem>>, %arg3: memref<256x128xf32, #tpu.memory_space<vmem>>, %arg4: memref<1x128xf32, #tpu.memory_space<vmem>>, %arg5: memref<128x128xf32, #tpu.memory_space<vmem>>, %arg6: memref<1x128xf32, #tpu.memory_space<vmem>>, %arg7: memref<16x128xf32, #tpu.memory_space<vmem>>) attributes {dimension_semantics = [#tpu.dimension_semantics<parallel>], iteration_bounds = array<i64: 1>, scalar_prefetch = 0 : i64, scratch_operands = 0 : i64, tpu.core_type = #tpu.core_type<tc>, window_params = [{transform_indices = @transform_0, window_bounds = array<i64: 16, 128>}, {transform_indices = @transform_1, window_bounds = array<i64: 3, 16, 128>}, {pipeline_mode = #tpu.pipeline_mode<synchronous>, transform_indices = @transform_2, window_bounds = array<i64: 256, 128>}, {pipeline_mode = #tpu.pipeline_mode<synchronous>, transform_indices = @transform_3, window_bounds = array<i64: 1, 128>}, {pipeline_mode = #tpu.pipeline_mode<synchronous>, transform_indices = @transform_4, window_bounds = array<i64: 128, 128>}, {pipeline_mode = #tpu.pipeline_mode<synchronous>, transform_indices = @transform_5, window_bounds = array<i64: 1, 128>}, {transform_indices = @transform_6, window_bounds = array<i64: 16, 128>}]} {
    %c0 = arith.constant 0 : index
    %c0_0 = arith.constant 0 : index
    %0 = vector.load %arg1[%c0, %c0_0] : memref<16x128xf32, #tpu.memory_space<vmem>>, vector<16x128xf32>
    %c0_1 = arith.constant 0 : index
    %c0_2 = arith.constant 0 : index
    %c0_3 = arith.constant 0 : index
    %1 = vector.load %arg2[%c0_1, %c0_2, %c0_3] : memref<3x16x128xf32, #tpu.memory_space<vmem>>, vector<3x16x128xf32>
    %cst = arith.constant dense<0.000000e+00> : vector<16x128xf32>
    %2 = vector.multi_reduction <add>, %1, %cst [0] : vector<3x16x128xf32> to vector<16x128xf32>
    %3 = tpu.concatenate %0, %2 in 1 : vector<16x128xf32>, vector<16x128xf32> -> vector<16x256xf32>
    %c0_4 = arith.constant 0 : index
    %c0_5 = arith.constant 0 : index
    %4 = vector.load %arg3[%c0_4, %c0_5] : memref<256x128xf32, #tpu.memory_space<vmem>>, vector<256x128xf32>
    %cst_6 = arith.constant dense<0.000000e+00> : vector<16x128xf32>
    %5 = tpu.matmul %3, %4, %cst_6 {dimension_numbers = #tpu.dot_dimension_numbers<[1], [0], [0], [1], [0, 0, 1, 1], [], []>} : vector<16x256xf32>, vector<256x128xf32>, vector<16x128xf32> -> vector<16x128xf32>
    %c0_7 = arith.constant 0 : index
    %c0_8 = arith.constant 0 : index
    %6 = vector.load %arg4[%c0_7, %c0_8] : memref<1x128xf32, #tpu.memory_space<vmem>>, vector<1x128xf32>
    %7 = vector.broadcast %6 : vector<1x128xf32> to vector<16x128xf32>
    %8 = arith.addf %5, %7 : vector<16x128xf32>
    %c0_9 = arith.constant 0 : index
    %c0_10 = arith.constant 0 : index
    %9 = vector.load %arg5[%c0_9, %c0_10] : memref<128x128xf32, #tpu.memory_space<vmem>>, vector<128x128xf32>
    %cst_11 = arith.constant dense<0.000000e+00> : vector<16x128xf32>
    %10 = tpu.matmul %8, %9, %cst_11 {dimension_numbers = #tpu.dot_dimension_numbers<[1], [0], [0], [1], [0, 0, 1, 1], [], []>} : vector<16x128xf32>, vector<128x128xf32>, vector<16x128xf32> -> vector<16x128xf32>
    %c0_12 = arith.constant 0 : index
    %c0_13 = arith.constant 0 : index
    %11 = vector.load %arg6[%c0_12, %c0_13] : memref<1x128xf32, #tpu.memory_space<vmem>>, vector<1x128xf32>
    %12 = vector.broadcast %11 : vector<1x128xf32> to vector<16x128xf32>
    %13 = arith.addf %10, %12 : vector<16x128xf32>
    %cst_14 = arith.constant 0.000000e+00 : f32
    %14 = vector.broadcast %cst_14 : f32 to vector<16x128xf32>
    %15 = arith.maximumf %13, %14 : vector<16x128xf32>
    %16 = arith.addf %15, %0 : vector<16x128xf32>
    %c0_15 = arith.constant 0 : index
    %c0_16 = arith.constant 0 : index
    %17 = vector.load %arg7[%c0_15, %c0_16] : memref<16x128xf32, #tpu.memory_space<vmem>>, vector<16x128xf32>
    tpu.vector_store %arg7[%c0_15, %c0_16], %16 {strides = array<i32>} : memref<16x128xf32, #tpu.memory_space<vmem>>, vector<16x128xf32>,
    return
  }
  func.func @transform_0(%arg0: i32) -> (i32, i32) {
    %c0_i32 = arith.constant 0 : i32
    %c0_i32_0 = arith.constant 0 : i32
    return %arg0, %c0_i32 : i32, i32
  }
  func.func @transform_1(%arg0: i32) -> (i32, i32, i32) {
    %c0_i32 = arith.constant 0 : i32
    %c0_i32_0 = arith.constant 0 : i32
    %c0_i32_1 = arith.constant 0 : i32
    return %c0_i32, %arg0, %c0_i32_0 : i32, i32, i32
  }
  func.func @transform_2(%arg0: i32) -> (i32, i32) {
    %c0_i32 = arith.constant 0 : i32
    %c0_i32_0 = arith.constant 0 : i32
    %c0_i32_1 = arith.constant 0 : i32
    return %c0_i32, %c0_i32_0 : i32, i32
  }
  func.func @transform_3(%arg0: i32) -> (i32, i32) {
    %c0_i32 = arith.constant 0 : i32
    %c0_i32_0 = arith.constant 0 : i32
    %c0_i32_1 = arith.constant 0 : i32
    return %c0_i32, %c0_i32_0 : i32, i32
  }
  func.func @transform_4(%arg0: i32) -> (i32, i32) {
    %c0_i32 = arith.constant 0 : i32
    %c0_i32_0 = arith.constant 0 : i32
    %c0_i32_1 = arith.constant 0 : i32
    return %c0_i32, %c0_i32_0 : i32, i32
  }
  func.func @transform_5(%arg0: i32) -> (i32, i32) {
    %c0_i32 = arith.constant 0 : i32
    %c0_i32_0 = arith.constant 0 : i32
    %c0_i32_1 = arith.constant 0 : i32
    return %c0_i32, %c0_i32_0 : i32, i32
  }
  func.func @transform_6(%arg0: i32) -> (i32, i32) {
    %c0_i32 = arith.constant 0 : i32
    %c0_i32_0 = arith.constant 0 : i32
    return %arg0, %c0_i32 : i32, i32
  }
}

</mosaic_0001>

<llo_original>
// kernel: tpu_custom_call.1
$region0: #{tpu_custom_call.1}
  #allocation0 [shape = 'u32[]', space=smem, size = 0x4, offset = 0x4, fixed_abs, tag = 'smem constant byte address 0x4 - core index']
  #allocation1 [shape = 'u32[72,128]{1,0:T(1,128)}', space=vmem, size = 0x9000, scoped, tag = 'internal scratch']
  %s0 = inlined_call_operand.hbm [shape: f32[16,128], index: 0, kind: input, shape index: {}]
  %s1 = inlined_call_operand.hbm [shape: f32[3,16,128], index: 1, kind: input, shape index: {}]
  %s2 = inlined_call_operand.hbm [shape: f32[256,128], index: 2, kind: input, shape index: {}]
  %s3 = inlined_call_operand.vmem [shape: f32[1,128], index: 3, kind: input, shape index: {}]
  %s4 = inlined_call_operand.hbm [shape: f32[128,128], index: 4, kind: input, shape index: {}]
  %s5 = inlined_call_operand.vmem [shape: f32[1,128], index: 5, kind: input, shape index: {}]
  %s6 = inlined_call_operand.hbm [shape: f32[16,128], index: 6, kind: output, shape index: {}]
  %s7 = sld [smem:[#allocation0]]
  $region50: #{tpu_custom_call.1} parent=0
    _
  %s9 = ssub.s32 1, %s7
  %s10 = scalar_select 0, %s9, %s7
  $region1: #{tpu_custom_call.1} parent=0
    #allocation2 [shape = 'u8[8192]{0}', space=vmem, size = 0x2000, scoped, tag = 'input window, operand 0, single buffered']
    #allocation3 [shape = 's32[1]{0}', space=sflag, size = 0x4, scoped, tag = 'scoped memory for tpu_custom_call.1']
    #allocation4 [shape = 's32[1]{0}', space=sflag, size = 0x4, scoped, tag = 'scoped memory for tpu_custom_call.1']
    #allocation5 [shape = 'u8[24576]{0}', space=vmem, size = 0x6000, scoped, tag = 'input window, operand 1, single buffered']
    #allocation6 [shape = 's32[1]{0}', space=sflag, size = 0x4, scoped, tag = 'scoped memory for tpu_custom_call.1']
    #allocation7 [shape = 'u8[131072]{0}', space=vmem, size = 0x20000, scoped, tag = 'input window, operand 2, single buffered']
    #allocation8 [shape = 'u8[65536]{0}', space=vmem, size = 0x10000, scoped, tag = 'input window, operand 4, single buffered']
    #allocation9 [shape = 's32[1]{0}', space=sflag, size = 0x4, scoped, tag = 'scoped memory for tpu_custom_call.1']
    #allocation10 [shape = 'u8[8192]{0}', space=vmem, size = 0x2000, scoped, tag = 'output window, operand 0, single buffered']
    %11 = vsyncpa [#allocation3], 0
    %12 = vsyncpa [#allocation6], 0
    %13 = vsyncpa [#allocation9], 0
    %14 = vsyncpa [#allocation4], 0
    // Predicated region
    $region2: #{tpu_custom_call.1} parent=1 // pred_check
      _
    $region3: #{tpu_custom_call.1} parent=1 // pred_check_branch
      %16 = sbr.rel (0) target = $region5
    $region4: #{tpu_custom_call.1} parent=1 // pred_region
      %18 = vsyncadd [#allocation3], 0
      %s19 = sshll.u32 %s0, 4
      %s20 = int_to_ptr.hbm [resolvable:$true] %s19
      %s21 = sshll.u32 [#allocation2], 4
      %s22 = int_to_ptr.vmem [resolvable:$true] %s21
      %27 = dma.hbm_to_vmem [thread:$0]  %s20, 256, %s22, [#allocation3], 128, 128, 8
    $region5: #{tpu_custom_call.1} parent=1 // pred_fallthru
      _
    // Predicated region
    $region6: #{tpu_custom_call.1} parent=1 // pred_check
      _
    $region7: #{tpu_custom_call.1} parent=1 // pred_check_branch
      %29 = sbr.rel (0) target = $region9
    $region8: #{tpu_custom_call.1} parent=1 // pred_region
      %31 = vsyncadd [#allocation6], 0
      %s32 = sshll.u32 %s1, 4
      %s33 = int_to_ptr.hbm [resolvable:$true] %s32
      %s34 = sshll.u32 [#allocation5], 4
      %s35 = int_to_ptr.vmem [resolvable:$true] %s34
      %40 = dma.hbm_to_vmem [thread:$0]  %s33, 768, %s35, [#allocation6], 128, 128, 8
    $region9: #{tpu_custom_call.1} parent=1 // pred_fallthru
      _
    // Predicated region
    $region10: #{tpu_custom_call.1} parent=1 // pred_check
      _
    $region11: #{tpu_custom_call.1} parent=1 // pred_check_branch
      %42 = sbr.rel (0) target = $region13
    $region12: #{tpu_custom_call.1} parent=1 // pred_region
      %44 = vsyncadd [#allocation6], 0
      %s45 = sshll.u32 %s2, 4
      %s46 = int_to_ptr.hbm [resolvable:$true] %s45
      %s47 = sshll.u32 [#allocation7], 4
      %s48 = int_to_ptr.vmem [resolvable:$true] %s47
      %53 = dma.hbm_to_vmem [thread:$0]  %s46, 4096, %s48, [#allocation6], 128, 128, 8
    $region13: #{tpu_custom_call.1} parent=1 // pred_fallthru
      _
    // Predicated region
    $region14: #{tpu_custom_call.1} parent=1 // pred_check
      _
    $region15: #{tpu_custom_call.1} parent=1 // pred_check_branch
      %55 = sbr.rel (0) target = $region17
    $region16: #{tpu_custom_call.1} parent=1 // pred_region
      _
    $region17: #{tpu_custom_call.1} parent=1 // pred_fallthru
      _
    // Predicated region
    $region18: #{tpu_custom_call.1} parent=1 // pred_check
      _
    $region19: #{tpu_custom_call.1} parent=1 // pred_check_branch
      %57 = sbr.rel (0) target = $region21
    $region20: #{tpu_custom_call.1} parent=1 // pred_region
      %59 = vsyncadd [#allocation9], 0
      %s60 = sshll.u32 %s4, 4
      %s61 = int_to_ptr.hbm [resolvable:$true] %s60
      %s62 = sshll.u32 [#allocation8], 4
      %s63 = int_to_ptr.vmem [resolvable:$true] %s62
      %68 = dma.hbm_to_vmem [thread:$0]  %s61, 2048, %s63, [#allocation9], 128, 128, 8
    $region21: #{tpu_custom_call.1} parent=1 // pred_fallthru
      _
    // Predicated region
    $region22: #{tpu_custom_call.1} parent=1 // pred_check
      _
    $region23: #{tpu_custom_call.1} parent=1 // pred_check_branch
      %70 = sbr.rel (0) target = $region25
    $region24: #{tpu_custom_call.1} parent=1 // pred_region
      _
    $region25: #{tpu_custom_call.1} parent=1 // pred_fallthru
      _
    // Predicated region
    $region26: #{tpu_custom_call.1} parent=1 // pred_check
      _
    $region27: #{tpu_custom_call.1} parent=1 // pred_check_branch
      %72 = sbr.rel (0) target = $region29
    $region28: #{tpu_custom_call.1} parent=1 // pred_region
      %74 = dma.done [#allocation3], 256
    $region29: #{tpu_custom_call.1} parent=1 // pred_fallthru
      _
    // Predicated region
    $region30: #{tpu_custom_call.1} parent=1 // pred_check
      _
    $region31: #{tpu_custom_call.1} parent=1 // pred_check_branch
      %76 = sbr.rel (0) target = $region33
    $region32: #{tpu_custom_call.1} parent=1 // pred_region
      %78 = dma.done [#allocation6], 768
    $region33: #{tpu_custom_call.1} parent=1 // pred_fallthru
      _
    // Predicated region
    $region34: #{tpu_custom_call.1} parent=1 // pred_check
      _
    $region35: #{tpu_custom_call.1} parent=1 // pred_check_branch
      %80 = sbr.rel (0) target = $region37
    $region36: #{tpu_custom_call.1} parent=1 // pred_region
      %82 = dma.done [#allocation6], 4096
    $region37: #{tpu_custom_call.1} parent=1 // pred_fallthru
      _
    // Predicated region
    $region38: #{tpu_custom_call.1} parent=1 // pred_check
      _
    $region39: #{tpu_custom_call.1} parent=1 // pred_check_branch
      %84 = sbr.rel (0) target = $region41
    $region40: #{tpu_custom_call.1} parent=1 // pred_region
      %86 = dma.done [#allocation9], 2048
    $region41: #{tpu_custom_call.1} parent=1 // pred_fallthru
      _
    %v87 = vld [vmem:[#allocation2] sm:$0xff]
    %v88 = vld [vmem:[#allocation2 + $0x8] sm:$0xff]
    %v89 = vld [vmem:[#allocation5] sm:$0xff]
    %v90 = vld [vmem:[#allocation5 + $0x8] sm:$0xff]
    %v91 = vld [vmem:[#allocation5 + $0x10] sm:$0xff]
    %v92 = vld [vmem:[#allocation5 + $0x18] sm:$0xff]
    %v93 = vld [vmem:[#allocation5 + $0x20] sm:$0xff]
    %v94 = vld [vmem:[#allocation5 + $0x28] sm:$0xff]
    %v95 = vadd.f32 %v89, %v91
    %v96 = vadd.f32 %v95, %v93
    %v97 = vadd.f32 %v90, %v92
    %v98 = vadd.f32 %v97, %v94
    %v99 = vld [vmem:[#allocation7] sm:$0xff]
    %v100 = vld [vmem:[#allocation7 + $0x8] sm:$0xff]
    %v101 = vld [vmem:[#allocation7 + $0x10] sm:$0xff]
    %v102 = vld [vmem:[#allocation7 + $0x18] sm:$0xff]
    %v103 = vld [vmem:[#allocation7 + $0x20] sm:$0xff]
    %v104 = vld [vmem:[#allocation7 + $0x28] sm:$0xff]
    %v105 = vld [vmem:[#allocation7 + $0x30] sm:$0xff]
    %v106 = vld [vmem:[#allocation7 + $0x38] sm:$0xff]
    %v107 = vld [vmem:[#allocation7 + $0x40] sm:$0xff]
    %v108 = vld [vmem:[#allocation7 + $0x48] sm:$0xff]
    %v109 = vld [vmem:[#allocation7 + $0x50] sm:$0xff]
    %v110 = vld [vmem:[#allocation7 + $0x58] sm:$0xff]
    %v111 = vld [vmem:[#allocation7 + $0x60] sm:$0xff]
    %v112 = vld [vmem:[#allocation7 + $0x68] sm:$0xff]
    %v113 = vld [vmem:[#allocation7 + $0x70] sm:$0xff]
    %v114 = vld [vmem:[#allocation7 + $0x78] sm:$0xff]
    %v115 = vld [vmem:[#allocation7 + $0x80] sm:$0xff]
    %v116 = vld [vmem:[#allocation7 + $0x88] sm:$0xff]
    %v117 = vld [vmem:[#allocation7 + $0x90] sm:$0xff]
    %v118 = vld [vmem:[#allocation7 + $0x98] sm:$0xff]
    %v119 = vld [vmem:[#allocation7 + $0xa0] sm:$0xff]
    %v120 = vld [vmem:[#allocation7 + $0xa8] sm:$0xff]
    %v121 = vld [vmem:[#allocation7 + $0xb0] sm:$0xff]
    %v122 = vld [vmem:[#allocation7 + $0xb8] sm:$0xff]
    %v123 = vld [vmem:[#allocation7 + $0xc0] sm:$0xff]
    %v124 = vld [vmem:[#allocation7 + $0xc8] sm:$0xff]
    %v125 = vld [vmem:[#allocation7 + $0xd0] sm:$0xff]
    %v126 = vld [vmem:[#allocation7 + $0xd8] sm:$0xff]
    %v127 = vld [vmem:[#allocation7 + $0xe0] sm:$0xff]
    %v128 = vld [vmem:[#allocation7 + $0xe8] sm:$0xff]
    %v129 = vld [vmem:[#allocation7 + $0xf0] sm:$0xff]
    %v130 = vld [vmem:[#allocation7 + $0xf8] sm:$0xff]
    %v131 = vld [vmem:[%s3] sm:$0x1]
    %v133 = vperm.slane %v131, 0
    %135 = vmatpush.msra.mxu0 %v114
    %136 = vmatpush.msra.mxu0 %v113
    %137 = vmatpush.msra.mxu0 %v112
    %138 = vmatpush.msra.mxu0 %v111
    %139 = vmatpush.msra.mxu0 %v110
    %140 = vmatpush.msra.mxu0 %v109
    %141 = vmatpush.msra.mxu0 %v108
    %142 = vmatpush.msra.mxu0 %v107
    %143 = vmatpush.msra.mxu0 %v106
    %144 = vmatpush.msra.mxu0 %v105
    %145 = vmatpush.msra.mxu0 %v104
    %146 = vmatpush.msra.mxu0 %v103
    %147 = vmatpush.msra.mxu0 %v102
    %148 = vmatpush.msra.mxu0 %v101
    %149 = vmatpush.msra.mxu0 %v100
    %150 = vmatpush.msra.mxu0 %v99
    %151 = vmatmul.f32.gmra.mxu0 %v87
    %v152 = vpop.f32.mrf.mxu0
    %v153 = vadd.f32 %v133, %v152
    %154 = vmatmul.f32.gmra.mxu0 %v88
    %v155 = vpop.f32.mrf.mxu0
    %v156 = vadd.f32 %v133, %v155
    %157 = vdwg.mxu0
    %158 = vmatpush.msra.mxu0 %v130
    %159 = vmatpush.msra.mxu0 %v129
    %160 = vmatpush.msra.mxu0 %v128
    %161 = vmatpush.msra.mxu0 %v127
    %162 = vmatpush.msra.mxu0 %v126
    %163 = vmatpush.msra.mxu0 %v125
    %164 = vmatpush.msra.mxu0 %v124
    %165 = vmatpush.msra.mxu0 %v123
    %166 = vmatpush.msra.mxu0 %v122
    %167 = vmatpush.msra.mxu0 %v121
    %168 = vmatpush.msra.mxu0 %v120
    %169 = vmatpush.msra.mxu0 %v119
    %170 = vmatpush.msra.mxu0 %v118
    %171 = vmatpush.msra.mxu0 %v117
    %172 = vmatpush.msra.mxu0 %v116
    %173 = vmatpush.msra.mxu0 %v115
    %174 = vmatmul.f32.gmra.mxu0 %v96
    %v175 = vpop.f32.mrf.mxu0
    %v176 = vadd.f32 %v153, %v175
    %177 = vmatmul.f32.gmra.mxu0 %v98
    %v178 = vpop.f32.mrf.mxu0
    %v179 = vadd.f32 %v156, %v178
    %180 = vdwg.mxu0
    %v181 = vld [vmem:[#allocation8] sm:$0xff]
    %v182 = vld [vmem:[#allocation8 + $0x8] sm:$0xff]
    %v183 = vld [vmem:[#allocation8 + $0x10] sm:$0xff]
    %v184 = vld [vmem:[#allocation8 + $0x18] sm:$0xff]
    %v185 = vld [vmem:[#allocation8 + $0x20] sm:$0xff]
    %v186 = vld [vmem:[#allocation8 + $0x28] sm:$0xff]
    %v187 = vld [vmem:[#allocation8 + $0x30] sm:$0xff]
    %v188 = vld [vmem:[#allocation8 + $0x38] sm:$0xff]
    %v189 = vld [vmem:[#allocation8 + $0x40] sm:$0xff]
    %v190 = vld [vmem:[#allocation8 + $0x48] sm:$0xff]
    %v191 = vld [vmem:[#allocation8 + $0x50] sm:$0xff]
    %v192 = vld [vmem:[#allocation8 + $0x58] sm:$0xff]
    %v193 = vld [vmem:[#allocation8 + $0x60] sm:$0xff]
    %v194 = vld [vmem:[#allocation8 + $0x68] sm:$0xff]
    %v195 = vld [vmem:[#allocation8 + $0x70] sm:$0xff]
    %v196 = vld [vmem:[#allocation8 + $0x78] sm:$0xff]
    %v197 = vld [vmem:[%s5] sm:$0x1]
    %v199 = vperm.slane %v197, 0
    %201 = vmatpush.msra.mxu0 %v196
    %202 = vmatpush.msra.mxu0 %v195
    %203 = vmatpush.msra.mxu0 %v194
    %204 = vmatpush.msra.mxu0 %v193
    %205 = vmatpush.msra.mxu0 %v192
    %206 = vmatpush.msra.mxu0 %v191
    %207 = vmatpush.msra.mxu0 %v190
    %208 = vmatpush.msra.mxu0 %v189
    %209 = vmatpush.msra.mxu0 %v188
    %210 = vmatpush.msra.mxu0 %v187
    %211 = vmatpush.msra.mxu0 %v186
    %212 = vmatpush.msra.mxu0 %v185
    %213 = vmatpush.msra.mxu0 %v184
    %214 = vmatpush.msra.mxu0 %v183
    %215 = vmatpush.msra.mxu0 %v182
    %216 = vmatpush.msra.mxu0 %v181
    %217 = vmatmul.f32.gmra.mxu0 %v176
    %v218 = vpop.f32.mrf.mxu0
    %v219 = vadd.f32 %v199, %v218
    %220 = vmatmul.f32.gmra.mxu0 %v179
    %v221 = vpop.f32.mrf.mxu0
    %v222 = vadd.f32 %v199, %v221
    %223 = vdwg.mxu0
    %v224 = vmax.f32 %v219, 0.0
    %v225 = vmax.f32 %v222, 0.0
    %v226 = vadd.f32 %v224, %v87
    %v227 = vadd.f32 %v225, %v88
    %228 = vst [vmem:[#allocation10] sm:$0xff] %v226
    %229 = vst [vmem:[#allocation10 + $0x8] sm:$0xff] %v227
    // Predicated region
    $region42: #{tpu_custom_call.1} parent=1 // pred_check
      _
    $region43: #{tpu_custom_call.1} parent=1 // pred_check_branch
      %231 = sbr.rel (0) target = $region45
    $region44: #{tpu_custom_call.1} parent=1 // pred_region
      %233 = vsyncadd [#allocation4], 0
      %s234 = sshll.u32 [#allocation10], 4
      %s235 = int_to_ptr.vmem [resolvable:$true] %s234
      %s236 = sshll.u32 %s6, 4
      %s237 = int_to_ptr.hbm [resolvable:$true] %s236
      %242 = dma.vmem_to_hbm [thread:$0]  %s235, 256, %s237, [#allocation4], 128, 128, 8
    $region45: #{tpu_custom_call.1} parent=1 // pred_fallthru
      _
    // Predicated region
    $region46: #{tpu_custom_call.1} parent=1 // pred_check
      _
    $region47: #{tpu_custom_call.1} parent=1 // pred_check_branch
      %244 = sbr.rel (0) target = $region49
    $region48: #{tpu_custom_call.1} parent=1 // pred_region
      %246 = dma.done [#allocation4], 256
    $region49: #{tpu_custom_call.1} parent=1 // pred_fallthru
      _
    %247 = vsyncpa [#allocation3], 1
    %248 = vsyncpa [#allocation6], 1
    %249 = vsyncpa [#allocation9], 1
    %250 = vsyncpa [#allocation4], 1

</llo_original>
